<compile_context>
chip_gen: v5e
topology: v5e:2x2
jax: 0.10.0
libtpu: 0.0.40
codegen_flags: <defaults>
</compile_context>

<pallas_src>
import jax
import jax.numpy as jnp
from jax.experimental import pallas as pl
from jax.experimental.pallas import tpu as pltpu


def _patch_embed_kernel(xp_ref, w_ref, b_ref, o_ref):
    # xp_ref: (tm, Kp)   -- Kp = in_chans*patch_size padded to 128
    # w_ref : (Kp, tn)   -- tn = hidden tile, multiple of 128
    # b_ref : (1, tn)
    # o_ref : (tm, tn)
    acc = jnp.dot(xp_ref[...], w_ref[...], preferred_element_type=jnp.float32)
    o_ref[...] = (acc + b_ref[...].astype(jnp.float32)).astype(o_ref.dtype)


def _round_up(x, m):
    return ((x + m - 1) // m) * m


def _choose_tile(dim, align, max_tile):
    """Pick a tile (multiple of `align`, <= max_tile) and the padded dim."""
    d = _round_up(dim, align)
    if d <= max_tile:
        return d, d
    # Prefer an exact divisor of the aligned dim (no edge padding) if a
    # reasonably large one exists; otherwise pad up to a multiple of max_tile.
    for t in range(max_tile, align - 1, -align):
        if d % t == 0 and t >= max(align, max_tile // 4):
            return t, d
    return max_tile, _round_up(d, max_tile)


def patch_embed(x, weight, bias, patch_size, *, tm_max=512, tn_max=512):
    """x: (B, C, W); weight: (H, C, P); bias: (H,) -> (B, W//P, H)."""
    B, C, W = x.shape
    H = weight.shape[0]
    P = patch_size
    Np = W // P  # trailing samples silently dropped, matching Conv1d stride=k

    # --- glue reshapes (plain JAX) -----------------------------------------
    x_use = x[:, :, : Np * P]
    xp = x_use.reshape(B, C, Np, P)
    xp = jnp.transpose(xp, (0, 2, 1, 3)).reshape(B * Np, C * P)   # (M, K)
    w_mat = weight.reshape(H, C * P).T                            # (K, N)
    b_mat = bias.reshape(1, H)                                    # (1, N)

    M, K = xp.shape
    N = H

    # --- padding / tiling ----------------------------------------------------
    K_pad = _round_up(K, 128)                 # lane-dense contraction depth
    tm, M_pad = _choose_tile(M, 8, tm_max)    # sublane-aligned M tiles
    tn, N_pad = _choose_tile(N, 128, tn_max)  # lane-dense output tiles

    xp_p = jnp.pad(xp, ((0, M_pad - M), (0, K_pad - K)))
    w_p = jnp.pad(w_mat, ((0, K_pad - K), (0, N_pad - N)))
    b_p = jnp.pad(b_mat, ((0, 0), (0, N_pad - N)))

    grid = (M_pad // tm, N_pad // tn)
    itemsize = jnp.dtype(x.dtype).itemsize
    cost = pl.CostEstimate(
        flops=2 * M_pad * K_pad * N_pad,
        transcendentals=0,
        bytes_accessed=itemsize
        * (M_pad * K_pad + K_pad * N_pad + N_pad + M_pad * N_pad),
    )

    # TODO(synk): optional bf16 cast of xp_p / w_p (keep f32 accumulation) would
    # halve HBM traffic but changes numerics vs the f32 Conv1d reference.
    out = pl.pallas_call(
        _patch_embed_kernel,
        out_shape=jax.ShapeDtypeStruct((M_pad, N_pad), x.dtype),
        grid_spec=pltpu.PrefetchScalarGridSpec(
            num_scalar_prefetch=0,
            grid=grid,
            in_specs=[
                pl.BlockSpec((tm, K_pad), lambda i, j: (i, 0)),
                pl.BlockSpec((K_pad, tn), lambda i, j: (0, j)),
                pl.BlockSpec((1, tn), lambda i, j: (0, j)),
            ],
            out_specs=pl.BlockSpec((tm, tn), lambda i, j: (i, j)),
        ),
        compiler_params=pltpu.CompilerParams(
            dimension_semantics=("parallel", "parallel")),
        cost_estimate=cost,
    )(xp_p, w_p, b_p)

    return out[:M, :N].reshape(B, Np, H)


def reference_patch_embed(x, weight, bias, patch_size):
    """Pure-JAX reference mirroring PyTorch Conv1d(k=s=patch) + flatten + transpose."""
    B, C, W = x.shape
    H = weight.shape[0]
    P = patch_size
    Np = W // P
    xu = x[:, :, : Np * P]
    xp = xu.reshape(B, C, Np, P).transpose(0, 2, 1, 3).reshape(B, Np, C * P)
    wm = weight.reshape(H, C * P)
    return jnp.einsum("bnk,hk->bnh", xp, wm) + bias[None, None, :]


def _run_case(batch, in_chans, window_size, patch_size, hidden_size, seed):
    key = jax.random.PRNGKey(seed)
    kx, kw, kb = jax.random.split(key, 3)
    x = jax.random.normal(kx, (batch, in_chans, window_size), dtype=jnp.float32)
    weight = jax.random.normal(
        kw, (hidden_size, in_chans, patch_size), dtype=jnp.float32) * 0.05
    bias = jax.random.normal(kb, (hidden_size,), dtype=jnp.float32) * 0.05

    out = patch_embed(x, weight, bias, patch_size)
    out = jax.block_until_ready(out)

    ref = reference_patch_embed(x, weight, bias, patch_size)
    np_ = window_size // patch_size
    assert out.shape == (batch, np_, hidden_size), out.shape
    assert jnp.allclose(out, ref, atol=1e-4, rtol=1e-4), "mismatch vs reference"


if __name__ == "__main__":
    # Small shapes consistent with the module: Conv1d(in_chans, hidden, k=patch, s=patch)
    _run_case(batch=2, in_chans=4, window_size=16, patch_size=2,
              hidden_size=32, seed=0)
    # Module-default geometry (still small) to exercise multi-tile N / tiled grid.
    _run_case(batch=2, in_chans=3, window_size=200, patch_size=2,
              hidden_size=768, seed=1)
    print("KERNEL_OK")
</pallas_src>

<mosaic_0001>
module attributes {stable_mosaic.version = 11 : i64} {
  func.func @_patch_embed_kernel(%arg0: i32, %arg1: i32, %arg2: memref<16x128xf32, #tpu.memory_space<vmem>>, %arg3: memref<128x128xf32, #tpu.memory_space<vmem>>, %arg4: memref<1x128xf32, #tpu.memory_space<vmem>>, %arg5: memref<16x128xf32, #tpu.memory_space<vmem>>) attributes {dimension_semantics = [#tpu.dimension_semantics<parallel>, #tpu.dimension_semantics<parallel>], iteration_bounds = array<i64: 1, 1>, scalar_prefetch = 0 : i64, scratch_operands = 0 : i64, tpu.core_type = #tpu.core_type<tc>, window_params = [{transform_indices = @transform_0, window_bounds = array<i64: 16, 128>}, {transform_indices = @transform_1, window_bounds = array<i64: 128, 128>}, {transform_indices = @transform_2, window_bounds = array<i64: 1, 128>}, {transform_indices = @transform_3, window_bounds = array<i64: 16, 128>}]} {
    %c0 = arith.constant 0 : index
    %c0_0 = arith.constant 0 : index
    %0 = vector.load %arg2[%c0, %c0_0] : memref<16x128xf32, #tpu.memory_space<vmem>>, vector<16x128xf32>
    %c0_1 = arith.constant 0 : index
    %c0_2 = arith.constant 0 : index
    %1 = vector.load %arg3[%c0_1, %c0_2] : memref<128x128xf32, #tpu.memory_space<vmem>>, vector<128x128xf32>
    %cst = arith.constant dense<0.000000e+00> : vector<16x128xf32>
    %2 = tpu.matmul %0, %1, %cst {dimension_numbers = #tpu.dot_dimension_numbers<[1], [0], [0], [1], [0, 0, 1, 1], [], []>} : vector<16x128xf32>, vector<128x128xf32>, vector<16x128xf32> -> vector<16x128xf32>
    %c0_3 = arith.constant 0 : index
    %c0_4 = arith.constant 0 : index
    %3 = vector.load %arg4[%c0_3, %c0_4] : memref<1x128xf32, #tpu.memory_space<vmem>>, vector<1x128xf32>
    %4 = vector.broadcast %3 : vector<1x128xf32> to vector<16x128xf32>
    %5 = arith.addf %2, %4 : vector<16x128xf32>
    %c0_5 = arith.constant 0 : index
    %c0_6 = arith.constant 0 : index
    %6 = vector.load %arg5[%c0_5, %c0_6] : memref<16x128xf32, #tpu.memory_space<vmem>>, vector<16x128xf32>
    tpu.vector_store %arg5[%c0_5, %c0_6], %5 {strides = array<i32>} : memref<16x128xf32, #tpu.memory_space<vmem>>, vector<16x128xf32>,
    return
  }
  func.func @transform_0(%arg0: i32, %arg1: i32) -> (i32, i32) {
    %c0_i32 = arith.constant 0 : i32
    %c0_i32_0 = arith.constant 0 : i32
    return %arg0, %c0_i32 : i32, i32
  }
  func.func @transform_1(%arg0: i32, %arg1: i32) -> (i32, i32) {
    %c0_i32 = arith.constant 0 : i32
    %c0_i32_0 = arith.constant 0 : i32
    return %c0_i32, %arg1 : i32, i32
  }
  func.func @transform_2(%arg0: i32, %arg1: i32) -> (i32, i32) {
    %c0_i32 = arith.constant 0 : i32
    %c0_i32_0 = arith.constant 0 : i32
    return %c0_i32, %arg1 : i32, i32
  }
  func.func @transform_3(%arg0: i32, %arg1: i32) -> (i32, i32) {
    %c0_i32 = arith.constant 0 : i32
    return %arg0, %arg1 : i32, i32
  }
}

</mosaic_0001>

<llo_original>
// kernel: tpu_custom_call.1
$region0: #{tpu_custom_call.1}
  #allocation0 [shape = 'u32[]', space=smem, size = 0x4, offset = 0x4, fixed_abs, tag = 'smem constant byte address 0x4 - core index']
  #allocation1 [shape = 'u32[72,128]{1,0:T(1,128)}', space=vmem, size = 0x9000, scoped, tag = 'internal scratch']
  %s0 = inlined_call_operand.hbm [shape: f32[16,128], index: 0, kind: input, shape index: {}]
  %s1 = inlined_call_operand.hbm [shape: f32[128,128], index: 1, kind: input, shape index: {}]
  %s2 = inlined_call_operand.vmem [shape: f32[1,128], index: 2, kind: input, shape index: {}]
  %s3 = inlined_call_operand.hbm [shape: f32[16,128], index: 3, kind: output, shape index: {}]
  %s4 = sld [smem:[#allocation0]]
  $region30: #{tpu_custom_call.1} parent=0
    _
  %s6 = ssub.s32 1, %s4
  %s7 = scalar_select 0, %s6, %s4
  $region1: #{tpu_custom_call.1} parent=0
    #allocation2 [shape = 'u8[8192]{0}', space=vmem, size = 0x2000, scoped, tag = 'input window, operand 0, single buffered']
    #allocation3 [shape = 's32[1]{0}', space=sflag, size = 0x4, scoped, tag = 'scoped memory for tpu_custom_call.1']
    #allocation4 [shape = 's32[1]{0}', space=sflag, size = 0x4, scoped, tag = 'scoped memory for tpu_custom_call.1']
    #allocation5 [shape = 'u8[65536]{0}', space=vmem, size = 0x10000, scoped, tag = 'input window, operand 1, single buffered']
    #allocation6 [shape = 's32[1]{0}', space=sflag, size = 0x4, scoped, tag = 'scoped memory for tpu_custom_call.1']
    #allocation7 [shape = 'u8[8192]{0}', space=vmem, size = 0x2000, scoped, tag = 'output window, operand 0, single buffered']
    %8 = vsyncpa [#allocation3], 0
    %9 = vsyncpa [#allocation6], 0
    %10 = vsyncpa [#allocation4], 0
    // Predicated region
    $region2: #{tpu_custom_call.1} parent=1 // pred_check
      _
    $region3: #{tpu_custom_call.1} parent=1 // pred_check_branch
      %12 = sbr.rel (0) target = $region5
    $region4: #{tpu_custom_call.1} parent=1 // pred_region
      %14 = vsyncadd [#allocation3], 0
      %s15 = sshll.u32 %s0, 4
      %s16 = int_to_ptr.hbm [resolvable:$true] %s15
      %s17 = sshll.u32 [#allocation2], 4
      %s18 = int_to_ptr.vmem [resolvable:$true] %s17
      %23 = dma.hbm_to_vmem [thread:$0]  %s16, 256, %s18, [#allocation3], 128, 128, 8
    $region5: #{tpu_custom_call.1} parent=1 // pred_fallthru
      _
    // Predicated region
    $region6: #{tpu_custom_call.1} parent=1 // pred_check
      _
    $region7: #{tpu_custom_call.1} parent=1 // pred_check_branch
      %25 = sbr.rel (0) target = $region9
    $region8: #{tpu_custom_call.1} parent=1 // pred_region
      %27 = vsyncadd [#allocation6], 0
      %s28 = sshll.u32 %s1, 4
      %s29 = int_to_ptr.hbm [resolvable:$true] %s28
      %s30 = sshll.u32 [#allocation5], 4
      %s31 = int_to_ptr.vmem [resolvable:$true] %s30
      %36 = dma.hbm_to_vmem [thread:$0]  %s29, 2048, %s31, [#allocation6], 128, 128, 8
    $region9: #{tpu_custom_call.1} parent=1 // pred_fallthru
      _
    // Predicated region
    $region10: #{tpu_custom_call.1} parent=1 // pred_check
      _
    $region11: #{tpu_custom_call.1} parent=1 // pred_check_branch
      %38 = sbr.rel (0) target = $region13
    $region12: #{tpu_custom_call.1} parent=1 // pred_region
      _
    $region13: #{tpu_custom_call.1} parent=1 // pred_fallthru
      _
    // Predicated region
    $region14: #{tpu_custom_call.1} parent=1 // pred_check
      _
    $region15: #{tpu_custom_call.1} parent=1 // pred_check_branch
      %40 = sbr.rel (0) target = $region17
    $region16: #{tpu_custom_call.1} parent=1 // pred_region
      %42 = dma.done [#allocation3], 256
    $region17: #{tpu_custom_call.1} parent=1 // pred_fallthru
      _
    // Predicated region
    $region18: #{tpu_custom_call.1} parent=1 // pred_check
      _
    $region19: #{tpu_custom_call.1} parent=1 // pred_check_branch
      %44 = sbr.rel (0) target = $region21
    $region20: #{tpu_custom_call.1} parent=1 // pred_region
      %46 = dma.done [#allocation6], 2048
    $region21: #{tpu_custom_call.1} parent=1 // pred_fallthru
      _
    %v47 = vld [vmem:[#allocation2] sm:$0xff]
    %v48 = vld [vmem:[#allocation2 + $0x8] sm:$0xff]
    %v49 = vld [vmem:[#allocation5] sm:$0xff]
    %v50 = vld [vmem:[#allocation5 + $0x8] sm:$0xff]
    %v51 = vld [vmem:[#allocation5 + $0x10] sm:$0xff]
    %v52 = vld [vmem:[#allocation5 + $0x18] sm:$0xff]
    %v53 = vld [vmem:[#allocation5 + $0x20] sm:$0xff]
    %v54 = vld [vmem:[#allocation5 + $0x28] sm:$0xff]
    %v55 = vld [vmem:[#allocation5 + $0x30] sm:$0xff]
    %v56 = vld [vmem:[#allocation5 + $0x38] sm:$0xff]
    %v57 = vld [vmem:[#allocation5 + $0x40] sm:$0xff]
    %v58 = vld [vmem:[#allocation5 + $0x48] sm:$0xff]
    %v59 = vld [vmem:[#allocation5 + $0x50] sm:$0xff]
    %v60 = vld [vmem:[#allocation5 + $0x58] sm:$0xff]
    %v61 = vld [vmem:[#allocation5 + $0x60] sm:$0xff]
    %v62 = vld [vmem:[#allocation5 + $0x68] sm:$0xff]
    %v63 = vld [vmem:[#allocation5 + $0x70] sm:$0xff]
    %v64 = vld [vmem:[#allocation5 + $0x78] sm:$0xff]
    %v65 = vld [vmem:[%s2] sm:$0x1]
    %v67 = vperm.slane %v65, 0
    %69 = vmatpush.msra.mxu0 %v64
    %70 = vmatpush.msra.mxu0 %v63
    %71 = vmatpush.msra.mxu0 %v62
    %72 = vmatpush.msra.mxu0 %v61
    %73 = vmatpush.msra.mxu0 %v60
    %74 = vmatpush.msra.mxu0 %v59
    %75 = vmatpush.msra.mxu0 %v58
    %76 = vmatpush.msra.mxu0 %v57
    %77 = vmatpush.msra.mxu0 %v56
    %78 = vmatpush.msra.mxu0 %v55
    %79 = vmatpush.msra.mxu0 %v54
    %80 = vmatpush.msra.mxu0 %v53
    %81 = vmatpush.msra.mxu0 %v52
    %82 = vmatpush.msra.mxu0 %v51
    %83 = vmatpush.msra.mxu0 %v50
    %84 = vmatpush.msra.mxu0 %v49
    %85 = vmatmul.f32.gmra.mxu0 %v47
    %v86 = vpop.f32.mrf.mxu0
    %v87 = vadd.f32 %v67, %v86
    %88 = vmatmul.f32.gmra.mxu0 %v48
    %v89 = vpop.f32.mrf.mxu0
    %v90 = vadd.f32 %v67, %v89
    %91 = vdwg.mxu0
    %92 = vst [vmem:[#allocation7] sm:$0xff] %v87
    %93 = vst [vmem:[#allocation7 + $0x8] sm:$0xff] %v90
    // Predicated region
    $region22: #{tpu_custom_call.1} parent=1 // pred_check
      _
    $region23: #{tpu_custom_call.1} parent=1 // pred_check_branch
      %95 = sbr.rel (0) target = $region25
    $region24: #{tpu_custom_call.1} parent=1 // pred_region
      %97 = vsyncadd [#allocation4], 0
      %s98 = sshll.u32 [#allocation7], 4
      %s99 = int_to_ptr.vmem [resolvable:$true] %s98
      %s100 = sshll.u32 %s3, 4
      %s101 = int_to_ptr.hbm [resolvable:$true] %s100
      %106 = dma.vmem_to_hbm [thread:$0]  %s99, 256, %s101, [#allocation4], 128, 128, 8
    $region25: #{tpu_custom_call.1} parent=1 // pred_fallthru
      _
    // Predicated region
    $region26: #{tpu_custom_call.1} parent=1 // pred_check
      _
    $region27: #{tpu_custom_call.1} parent=1 // pred_check_branch
      %108 = sbr.rel (0) target = $region29
    $region28: #{tpu_custom_call.1} parent=1 // pred_region
      %110 = dma.done [#allocation4], 256
    $region29: #{tpu_custom_call.1} parent=1 // pred_fallthru
      _
    %111 = vsyncpa [#allocation3], 1
    %112 = vsyncpa [#allocation6], 1
    %113 = vsyncpa [#allocation4], 1

</llo_original>
